<compile_context>
chip_gen: v7x
topology: tpu7x:2x2x1
jax: 0.10.0
libtpu: 0.0.40
codegen_flags: <defaults>
</compile_context>

<pallas_src>
import functools

import jax
import jax.numpy as jnp
from jax.experimental import pallas as pl
from jax.experimental.pallas import tpu as pltpu


# ---------------------------------------------------------------------------
# Kernels
# ---------------------------------------------------------------------------

def _cls_kernel(tok_ref, lab_ref, out_ref):
    # tok_ref: (TB, TS_cls, H)  -- only the first few sequence positions DMA'd
    # lab_ref: (L_pad, H)       -- pre-normalized labels, resident across grid
    # out_ref: (TB, L_pad)
    pooled = tok_ref[...][:, 0, :].astype(jnp.float32)              # (TB, H)
    # torch F.normalize: x / max(||x||, 1e-12) == x * rsqrt(max(sumsq, 1e-24))
    ss = jnp.sum(pooled * pooled, axis=1, keepdims=True)            # (TB, 1)
    pooled_n = pooled * jax.lax.rsqrt(jnp.maximum(ss, 1e-24))
    out_ref[...] = jax.lax.dot_general(
        pooled_n, lab_ref[...].astype(jnp.float32),
        dimension_numbers=(((1,), (1,)), ((), ())),
        preferred_element_type=jnp.float32,
    ).astype(out_ref.dtype)


def _reduce_kernel(tok_ref, mask_ref, lab_ref, out_ref, acc_ref, cnt_ref, *,
                   pooling):
    # tok_ref : (TB, TS, H)   mask_ref: (TB, TS)   lab_ref: (L_pad, H)
    # out_ref : (TB, L_pad)   acc_ref : (TB, H)    cnt_ref: (TB, 1)
    s = pl.program_id(1)
    ns = pl.num_programs(1)

    @pl.when(s == 0)
    def _init():
        if pooling == "max":
            acc_ref[...] = jnp.full_like(acc_ref, -1.0e9)
        else:  # mean
            acc_ref[...] = jnp.zeros_like(acc_ref)
            cnt_ref[...] = jnp.zeros_like(cnt_ref)

    tok = tok_ref[...].astype(jnp.float32)            # (TB, TS, H)
    mask = mask_ref[...].astype(jnp.float32)          # (TB, TS)

    if pooling == "max":
        masked = jnp.where(mask[:, :, None] == 0.0, -1.0e9, tok)
        acc_ref[...] = jnp.maximum(acc_ref[...], jnp.max(masked, axis=1))
    else:  # mean
        acc_ref[...] += jnp.sum(tok * mask[:, :, None], axis=1)
        cnt_ref[...] += jnp.sum(mask, axis=1, keepdims=True)

    @pl.when(s == ns - 1)
    def _finalize():
        pooled = acc_ref[...]
        if pooling == "mean":
            pooled = pooled / jnp.maximum(cnt_ref[...], 1e-9)
        ss = jnp.sum(pooled * pooled, axis=1, keepdims=True)
        pooled_n = pooled * jax.lax.rsqrt(jnp.maximum(ss, 1e-24))
        out_ref[...] = jax.lax.dot_general(
            pooled_n, lab_ref[...].astype(jnp.float32),
            dimension_numbers=(((1,), (1,)), ((), ())),
            preferred_element_type=jnp.float32,
        ).astype(out_ref.dtype)


# ---------------------------------------------------------------------------
# Wrapper
# ---------------------------------------------------------------------------

def _pick_block_b(B):
    if B % 8 == 0:
        for cand in (128, 64, 32, 16, 8):
            if B % cand == 0:
                return cand
    return B  # small / ragged batch: one full-B block (equals full dim -> legal)


def _pick_block_s(S):
    # Mask block (TB, TS) requires TS to be a multiple of 128 or the full S.
    for cand in (512, 256, 128):
        if S % cand == 0:
            return cand
    return S


def cosine_mapper_forward(token_embeddings, attention_mask, label_embeddings,
                          pooling="mean", *, block_b=None, block_s=None):
    """Pooling + normalize + cosine-similarity hot path in Pallas."""
    B, S, H = token_embeddings.shape
    L, H2 = label_embeddings.shape
    assert H == H2, "hidden dims must match"

    if block_b is None:
        block_b = _pick_block_b(B)
    assert B % block_b == 0
    grid_b = B // block_b

    # Normalize labels once outside the kernel (tiny L x H) and pad L up to a
    # multiple of 128 for lane-dense output stores / a fuller MXU N dim.
    lab = label_embeddings.astype(jnp.float32)
    lab_n = lab / jnp.maximum(
        jnp.sqrt(jnp.sum(lab * lab, axis=1, keepdims=True)), 1e-12)
    L_pad = ((L + 127) // 128) * 128
    if L_pad != L:
        lab_n = jnp.pad(lab_n, ((0, L_pad - L), (0, 0)))

    if pooling == "cls":
        ts_cls = 8 if S >= 8 else S            # only first sublane tile of S
        kernel = _cls_kernel
        grid = (grid_b,)
        in_specs = [
            pl.BlockSpec((block_b, ts_cls, H), lambda b: (b, 0, 0)),
            pl.BlockSpec((L_pad, H), lambda b: (0, 0)),
        ]
        out_specs = pl.BlockSpec((block_b, L_pad), lambda b: (b, 0))
        scratch_shapes = []
        dim_sem = ("parallel",)
        args = (token_embeddings, lab_n)
        tok_tile_bytes = block_b * ts_cls * H * token_embeddings.dtype.itemsize
        mask_tile_bytes = 0
    elif pooling in ("max", "mean"):
        if block_s is None:
            block_s = _pick_block_s(S)
        assert S % block_s == 0
        grid_s = S // block_s
        kernel = functools.partial(_reduce_kernel, pooling=pooling)
        grid = (grid_b, grid_s)
        in_specs = [
            pl.BlockSpec((block_b, block_s, H), lambda b, s: (b, s, 0)),
            pl.BlockSpec((block_b, block_s), lambda b, s: (b, s)),
            pl.BlockSpec((L_pad, H), lambda b, s: (0, 0)),
        ]
        out_specs = pl.BlockSpec((block_b, L_pad), lambda b, s: (b, 0))
        scratch_shapes = [
            pltpu.VMEM((block_b, H), jnp.float32),   # running sum / max
            pltpu.VMEM((block_b, 1), jnp.float32),   # token counts (mean)
        ]
        dim_sem = ("parallel", "arbitrary")
        args = (token_embeddings, attention_mask, lab_n)
        tok_tile_bytes = block_b * block_s * H * token_embeddings.dtype.itemsize
        mask_tile_bytes = block_b * block_s * attention_mask.dtype.itemsize
    else:
        raise ValueError("Unknown pooling method")

    # VMEM budget: double-buffered input tiles + resident labels/output +
    # scratch, with 2x headroom; floor at 32 MiB, cap below v6e physical.
    est = (2 * (tok_tile_bytes + mask_tile_bytes)
           + L_pad * H * 4 + 2 * block_b * L_pad * 4
           + block_b * (H + 128) * 4)
    vmem_limit = int(min(max(2 * est, 32 << 20), 120 << 20))

    out = pl.pallas_call(
        kernel,
        out_shape=jax.ShapeDtypeStruct((B, L_pad), jnp.float32),
        grid_spec=pltpu.PrefetchScalarGridSpec(
            num_scalar_prefetch=0,
            grid=grid,
            in_specs=in_specs,
            out_specs=out_specs,
            scratch_shapes=scratch_shapes,
        ),
        compiler_params=pltpu.CompilerParams(
            dimension_semantics=dim_sem,
            vmem_limit_bytes=vmem_limit,
        ),
    )(*args)

    return out[:, :L] if L_pad != L else out


# ---------------------------------------------------------------------------
# Pure-JAX reference (mirrors the PyTorch forward)
# ---------------------------------------------------------------------------

def _reference(token_embeddings, attention_mask, label_embeddings, pooling):
    tok = token_embeddings.astype(jnp.float32)
    mask = attention_mask.astype(jnp.float32)
    lab = label_embeddings.astype(jnp.float32)
    if pooling == "cls":
        pooled = tok[:, 0]
    elif pooling == "max":
        masked = jnp.where(mask[:, :, None] == 0.0, -1.0e9, tok)
        pooled = jnp.max(masked, axis=1)
    else:
        m = mask[:, :, None]
        pooled = jnp.sum(tok * m, axis=1) / jnp.clip(jnp.sum(m, axis=1), 1e-9)
    pn = pooled / jnp.maximum(jnp.linalg.norm(pooled, axis=1, keepdims=True), 1e-12)
    ln = lab / jnp.maximum(jnp.linalg.norm(lab, axis=1, keepdims=True), 1e-12)
    return pn @ ln.T


if __name__ == "__main__":
    # Small shapes consistent with the module: batch=2, seq=8, hidden=32, labels=4.
    B, S, H, L = 2, 8, 32, 4
    key = jax.random.PRNGKey(0)
    k_tok, k_lab = jax.random.split(key)

    # TODO(synk): the HF tokenizer + BERT encoder (and the eval-time identity
    # Dropout / unused GELU) have no Pallas equivalent; we synthesize the
    # encoder outputs (token embeddings + attention mask) directly.
    token_embeddings = jax.random.normal(k_tok, (B, S, H), dtype=jnp.float32)
    attention_mask = jnp.concatenate(
        [jnp.ones((B, S - 2), jnp.float32), jnp.zeros((B, 2), jnp.float32)],
        axis=1)  # last 2 positions padded
    label_embeddings = jax.random.normal(k_lab, (L, H), dtype=jnp.float32)

    ok = True
    for pooling in ("cls", "max", "mean"):
        out = cosine_mapper_forward(
            token_embeddings, attention_mask, label_embeddings, pooling)
        out = jax.block_until_ready(out)
        ref = _reference(token_embeddings, attention_mask, label_embeddings,
                         pooling)
        if out.shape != ref.shape or not jnp.allclose(out, ref, atol=1e-5,
                                                      rtol=1e-5):
            ok = False
    if ok:
        print("KERNEL_OK")
</pallas_src>

<mosaic_0001>
module attributes {stable_mosaic.version = 11 : i64} {
  func.func @_cls_kernel(%arg0: i32, %arg1: memref<2x8x32xf32, #tpu.memory_space<vmem>>, %arg2: memref<128x32xf32, #tpu.memory_space<vmem>>, %arg3: memref<2x128xf32, #tpu.memory_space<vmem>>) attributes {dimension_semantics = [#tpu.dimension_semantics<parallel>], iteration_bounds = array<i64: 1>, scalar_prefetch = 0 : i64, scratch_operands = 0 : i64, tpu.core_type = #tpu.core_type<tc>, window_params = [{transform_indices = @transform_0, window_bounds = array<i64: 2, 8, 32>}, {pipeline_mode = #tpu.pipeline_mode<synchronous>, transform_indices = @transform_1, window_bounds = array<i64: 128, 32>}, {transform_indices = @transform_2, window_bounds = array<i64: 2, 128>}]} {
    %c0 = arith.constant 0 : index
    %c0_0 = arith.constant 0 : index
    %c0_1 = arith.constant 0 : index
    %0 = vector.load %arg1[%c0, %c0_0, %c0_1] : memref<2x8x32xf32, #tpu.memory_space<vmem>>, vector<2x8x32xf32>
    %1 = vector.extract_strided_slice %0 {offsets = [0, 0, 0], sizes = [2, 1, 32], strides = [1, 1, 1]} : vector<2x8x32xf32> to vector<2x1x32xf32>
    %2 = vector.shape_cast %1 : vector<2x1x32xf32> to vector<2x32xf32>
    %3 = arith.mulf %2, %2 : vector<2x32xf32>
    %cst = arith.constant dense<0.000000e+00> : vector<2xf32>
    %4 = vector.multi_reduction <add>, %3, %cst [1] : vector<2x32xf32> to vector<2xf32>
    %5 = vector.shape_cast %4 : vector<2xf32> to vector<2x1xf32>
    %cst_2 = arith.constant 1.000000e-24 : f32
    %6 = vector.broadcast %cst_2 : f32 to vector<2x1xf32>
    %7 = arith.maximumf %5, %6 : vector<2x1xf32>
    %8 = math.rsqrt %7 : vector<2x1xf32>
    %9 = vector.broadcast %8 : vector<2x1xf32> to vector<2x32xf32>
    %10 = arith.mulf %2, %9 : vector<2x32xf32>
    %c0_3 = arith.constant 0 : index
    %c0_4 = arith.constant 0 : index
    %11 = vector.load %arg2[%c0_3, %c0_4] : memref<128x32xf32, #tpu.memory_space<vmem>>, vector<128x32xf32>
    %cst_5 = arith.constant dense<0.000000e+00> : vector<2x128xf32>
    %12 = tpu.matmul %10, %11, %cst_5 {dimension_numbers = #tpu.dot_dimension_numbers<[1], [1], [0], [0], [0, 0, 1, 0], [], []>} : vector<2x32xf32>, vector<128x32xf32>, vector<2x128xf32> -> vector<2x128xf32>
    %c0_6 = arith.constant 0 : index
    %c0_7 = arith.constant 0 : index
    %13 = vector.load %arg3[%c0_6, %c0_7] : memref<2x128xf32, #tpu.memory_space<vmem>>, vector<2x128xf32>
    tpu.vector_store %arg3[%c0_6, %c0_7], %12 {strides = array<i32>} : memref<2x128xf32, #tpu.memory_space<vmem>>, vector<2x128xf32>,
    return
  }
  func.func @transform_0(%arg0: i32) -> (i32, i32, i32) {
    %c0_i32 = arith.constant 0 : i32
    %c0_i32_0 = arith.constant 0 : i32
    %c0_i32_1 = arith.constant 0 : i32
    return %arg0, %c0_i32, %c0_i32_0 : i32, i32, i32
  }
  func.func @transform_1(%arg0: i32) -> (i32, i32) {
    %c0_i32 = arith.constant 0 : i32
    %c0_i32_0 = arith.constant 0 : i32
    %c0_i32_1 = arith.constant 0 : i32
    return %c0_i32, %c0_i32_0 : i32, i32
  }
  func.func @transform_2(%arg0: i32) -> (i32, i32) {
    %c0_i32 = arith.constant 0 : i32
    %c0_i32_0 = arith.constant 0 : i32
    return %arg0, %c0_i32 : i32, i32
  }
}

</mosaic_0001>

<llo_original>
// kernel: tpu_custom_call.1
$region0: #{tpu_custom_call.1}
  #allocation0 [shape = 'u32[]', space=smem, size = 0x4, offset = 0x4, fixed_abs, tag = 'smem constant byte address 0x4 - core index']
  #allocation1 [shape = 'u32[144,128]{1,0:T(1,128)}', space=vmem, size = 0x12000, scoped, tag = 'internal scratch']
  %s0 = inlined_call_operand.vmem [shape: f32[2,8,32], index: 0, kind: input, shape index: {}]
  %s1 = inlined_call_operand.vmem [shape: f32[128,32], index: 1, kind: input, shape index: {}]
  %s2 = inlined_call_operand.hbm [shape: f32[2,128], index: 2, kind: output, shape index: {}]
  %s3 = sld [smem:[#allocation0]]
  $region18: #{tpu_custom_call.1} parent=0
    _
  %s5 = ssub.s32 1, %s3
  %s6 = scalar_select 0, %s5, %s3
  $region1: #{tpu_custom_call.1} parent=0
    #allocation2 [shape = 'u8[1024]{0}', space=vmem, size = 0x400, scoped, tag = 'output window, operand 0, single buffered']
    #allocation3 [shape = 's32[1]{0}', space=sflag, size = 0x4, scoped, tag = 'scoped memory for tpu_custom_call.1']
    %7 = vsyncpa [#allocation3], 0
    // Predicated region
    $region2: #{tpu_custom_call.1} parent=1 // pred_check
      _
    $region3: #{tpu_custom_call.1} parent=1 // pred_check_branch
      %9 = sbr.rel (0) target = $region5
    $region4: #{tpu_custom_call.1} parent=1 // pred_region
      _
    $region5: #{tpu_custom_call.1} parent=1 // pred_fallthru
      _
    // Predicated region
    $region6: #{tpu_custom_call.1} parent=1 // pred_check
      _
    $region7: #{tpu_custom_call.1} parent=1 // pred_check_branch
      %11 = sbr.rel (0) target = $region9
    $region8: #{tpu_custom_call.1} parent=1 // pred_region
      _
    $region9: #{tpu_custom_call.1} parent=1 // pred_fallthru
      _
    %v12 = vld [vmem:[%s0] sm:$0xff]
    %v13 = vld [vmem:[%s0 + $0x8] sm:$0xff]
    %v14 = vmul.f32 %v12, %v12
    %v15 = vmul.f32 %v13, %v13
    %v18 = vrot.slane %v15, 7
    %vm19 = vcmask 1041409
    %v20 = vsel %vm19, %v18, %v14
    %vm22 = vcmask 254976
    %v23 = vsel %vm22, %v20, 0.0
    %24 = vadd.xlane.f32.xlu0 %v23
    %v25 = vpop.xlane.xlu0 %24
    %v26 = vmax.f32 %v25, 1e-24
    %v27 = vrsqrt.pop %v26
    %v29 = vrot.slane %v27, 1
    %v32 = vmul.f32 %v12, %v27
    %v33 = vmul.f32 %v13, %v29
    %v34 = vld [vmem:[%s1] sm:$0xff]
    %v35 = vld [vmem:[%s1 + $0x8] sm:$0xff]
    %v36 = vld [vmem:[%s1 + $0x10] sm:$0xff]
    %v37 = vld [vmem:[%s1 + $0x18] sm:$0xff]
    %v38 = vld [vmem:[%s1 + $0x20] sm:$0xff]
    %v39 = vld [vmem:[%s1 + $0x28] sm:$0xff]
    %v40 = vld [vmem:[%s1 + $0x30] sm:$0xff]
    %v41 = vld [vmem:[%s1 + $0x38] sm:$0xff]
    %v42 = vld [vmem:[%s1 + $0x40] sm:$0xff]
    %v43 = vld [vmem:[%s1 + $0x48] sm:$0xff]
    %v44 = vld [vmem:[%s1 + $0x50] sm:$0xff]
    %v45 = vld [vmem:[%s1 + $0x58] sm:$0xff]
    %v46 = vld [vmem:[%s1 + $0x60] sm:$0xff]
    %v47 = vld [vmem:[%s1 + $0x68] sm:$0xff]
    %v48 = vld [vmem:[%s1 + $0x70] sm:$0xff]
    %v49 = vld [vmem:[%s1 + $0x78] sm:$0xff]
    %v52 = vrot.slane %v33, 7
    %v53 = vsel %vm19, %v52, %v32
    %vm54 = vcmask 261120
    %v55 = vsel %vm54, %v53, 0
    %v58 = vsel %vm54, %v34, 0
    %v61 = vsel %vm54, %v35, 0
    %v64 = vsel %vm54, %v36, 0
    %v67 = vsel %vm54, %v37, 0
    %v70 = vsel %vm54, %v38, 0
    %v73 = vsel %vm54, %v39, 0
    %v76 = vsel %vm54, %v40, 0
    %v79 = vsel %vm54, %v41, 0
    %v82 = vsel %vm54, %v42, 0
    %v85 = vsel %vm54, %v43, 0
    %v88 = vsel %vm54, %v44, 0
    %v91 = vsel %vm54, %v45, 0
    %v94 = vsel %vm54, %v46, 0
    %v97 = vsel %vm54, %v47, 0
    %v100 = vsel %vm54, %v48, 0
    %v103 = vsel %vm54, %v49, 0
    %105 = vmatprep.subr.mxu0 0.0
    %106 = vmatpush1.xpose.msra.mxu0 %v58
    %107 = vmatprep.subr.mxu0 0.0
    %108 = vmatpush1.xpose.msra.mxu0 %v61
    %109 = vmatprep.subr.mxu0 0.0
    %110 = vmatpush1.xpose.msra.mxu0 %v64
    %111 = vmatprep.subr.mxu0 0.0
    %112 = vmatpush1.xpose.msra.mxu0 %v67
    %113 = vmatprep.subr.mxu0 0.0
    %114 = vmatpush1.xpose.msra.mxu0 %v70
    %115 = vmatprep.subr.mxu0 0.0
    %116 = vmatpush1.xpose.msra.mxu0 %v73
    %117 = vmatprep.subr.mxu0 0.0
    %118 = vmatpush1.xpose.msra.mxu0 %v76
    %119 = vmatprep.subr.mxu0 0.0
    %120 = vmatpush1.xpose.msra.mxu0 %v79
    %121 = vmatprep.subr.mxu0 0.0
    %122 = vmatpush1.xpose.msra.mxu0 %v82
    %123 = vmatprep.subr.mxu0 0.0
    %124 = vmatpush1.xpose.msra.mxu0 %v85
    %125 = vmatprep.subr.mxu0 0.0
    %126 = vmatpush1.xpose.msra.mxu0 %v88
    %127 = vmatprep.subr.mxu0 0.0
    %128 = vmatpush1.xpose.msra.mxu0 %v91
    %129 = vmatprep.subr.mxu0 0.0
    %130 = vmatpush1.xpose.msra.mxu0 %v94
    %131 = vmatprep.subr.mxu0 0.0
    %132 = vmatpush1.xpose.msra.mxu0 %v97
    %133 = vmatprep.subr.mxu0 0.0
    %134 = vmatpush1.xpose.msra.mxu0 %v100
    %135 = vmatprep.subr.mxu0 0.0
    %136 = vmatpush1.xpose.msra.mxu0 %v103
    %137 = vmatprep.subr.mxu0 0.0
    %138 = vmatpush1.xpose.msra.mxu0 0.0
    %139 = vmatprep.subr.mxu0 0.0
    %140 = vmatpush1.xpose.msra.mxu0 0.0
    %141 = vmatprep.subr.mxu0 0.0
    %142 = vmatpush1.xpose.msra.mxu0 0.0
    %143 = vmatprep.subr.mxu0 0.0
    %144 = vmatpush1.xpose.msra.mxu0 0.0
    %145 = vmatprep.subr.mxu0 0.0
    %146 = vmatpush1.xpose.msra.mxu0 0.0
    %147 = vmatprep.subr.mxu0 0.0
    %148 = vmatpush1.xpose.msra.mxu0 0.0
    %149 = vmatprep.subr.mxu0 0.0
    %150 = vmatpush1.xpose.msra.mxu0 0.0
    %151 = vmatprep.subr.mxu0 0.0
    %152 = vmatpush1.xpose.msra.mxu0 0.0
    %153 = vmatprep.subr.mxu0 0.0
    %154 = vmatpush1.xpose.msra.mxu0 0.0
    %155 = vmatprep.subr.mxu0 0.0
    %156 = vmatpush1.xpose.msra.mxu0 0.0
    %157 = vmatprep.subr.mxu0 0.0
    %158 = vmatpush1.xpose.msra.mxu0 0.0
    %159 = vmatprep.subr.mxu0 0.0
    %160 = vmatpush1.xpose.msra.mxu0 0.0
    %161 = vmatprep.subr.mxu0 0.0
    %162 = vmatpush1.xpose.msra.mxu0 0.0
    %163 = vmatprep.subr.mxu0 0.0
    %164 = vmatpush1.xpose.msra.mxu0 0.0
    %165 = vmatprep.subr.mxu0 0.0
    %166 = vmatpush1.xpose.msra.mxu0 0.0
    %167 = vmatprep.subr.mxu0 0.0
    %168 = vmatpush1.xpose.msra.mxu0 0.0
    %169 = vmatprep.mubr.f32.mxu0 0.0
    %170 = vmatmul.mubr.f32.gmra.mrb[0].mxu0 %v55
    %v171 = vpop.f32.mrb[0].mxu0
    %v172 = vadd.f32 0.0, %v171
    %v173 = vpop.f32.mrb[0].mxu0
    %174 = vdwg.mxu0
    %175 = vst [vmem:[#allocation2] sm:$0x3] %v172
    // Predicated region
    $region10: #{tpu_custom_call.1} parent=1 // pred_check
      _
    $region11: #{tpu_custom_call.1} parent=1 // pred_check_branch
      %177 = sbr.rel (0) target = $region13
    $region12: #{tpu_custom_call.1} parent=1 // pred_region
      %s179 = ssub.s32 32, 32
      %180 = vsyncadd [#allocation3], %s179
      %s182 = sshll.u32 [#allocation2], 4
      %s183 = int_to_ptr.vmem [resolvable:$true] %s182
      %185 = dma.vmem_to_hbm [thread:$0]  %s183, 32, %s2, [#allocation3]
    $region13: #{tpu_custom_call.1} parent=1 // pred_fallthru
      _
    // Predicated region
    $region14: #{tpu_custom_call.1} parent=1 // pred_check
      _
    $region15: #{tpu_custom_call.1} parent=1 // pred_check_branch
      %187 = sbr.rel (0) target = $region17
    $region16: #{tpu_custom_call.1} parent=1 // pred_region
      %188 = dma.done [#allocation3], 32
    $region17: #{tpu_custom_call.1} parent=1 // pred_fallthru
      _
    %189 = vsyncpa [#allocation3], 1

</llo_original>
